<compile_context>
chip_gen: v6e
topology: v6e:2x2x1
jax: 0.10.0
libtpu: 0.0.40
codegen_flags: <defaults>
</compile_context>

<pallas_src>
import functools
import math

import jax
import jax.numpy as jnp
from jax.experimental import pallas as pl
from jax.experimental.pallas import tpu as pltpu

BN_EPS = 1e-5


def _round_up(x, m):
    return (x + m - 1) // m * m


def _pick_tile(sz, candidates):
    for c in candidates:
        if sz % c == 0:
            return c
    return candidates[-1]


# ---------------------------------------------------------------------------
# Pallas kernels
# ---------------------------------------------------------------------------

def _make_matmul_kernel(has_pre, pre_relu, has_post, post_relu):
    """[per-K-col affine (+ReLU)] -> bf16 MXU matmul (f32 acc) -> [per-N-col affine] [+ReLU]."""
    def kernel(*refs):
        i = 0
        if has_pre:
            ps_ref, pt_ref = refs[0], refs[1]
            i = 2
        a_ref, b_ref = refs[i], refs[i + 1]
        i += 2
        if has_post:
            qs_ref, qt_ref = refs[i], refs[i + 1]
            i += 2
        o_ref, acc_ref = refs[i], refs[i + 1]

        @pl.when(pl.program_id(2) == 0)
        def _():
            acc_ref[...] = jnp.zeros_like(acc_ref)

        a = a_ref[...]
        if has_pre:
            a = a * ps_ref[...] + pt_ref[...]
            if pre_relu:
                a = jnp.maximum(a, 0.0)
        acc_ref[...] += jnp.dot(a.astype(jnp.bfloat16), b_ref[...],
                                preferred_element_type=jnp.float32)

        @pl.when(pl.program_id(2) == pl.num_programs(2) - 1)
        def _():
            r = acc_ref[...]
            if has_post:
                r = r * qs_ref[...] + qt_ref[...]
            if post_relu:
                r = jnp.maximum(r, 0.0)
            o_ref[...] = r.astype(o_ref.dtype)

    return kernel


@functools.partial(
    jax.jit,
    static_argnames=("has_pre", "pre_relu", "has_post", "post_relu", "tm", "tn", "tk"))
def _matmul_padded(a, b, pre_s, pre_t, post_s, post_t,
                   has_pre, pre_relu, has_post, post_relu, tm, tn, tk):
    Mp, Kp = a.shape
    _, Np = b.shape
    operands, in_specs = [], []
    if has_pre:
        operands += [pre_s, pre_t]
        in_specs += [pl.BlockSpec((1, tk), lambda i, j, k: (0, k)),
                     pl.BlockSpec((1, tk), lambda i, j, k: (0, k))]
    operands += [a, b]
    in_specs += [pl.BlockSpec((tm, tk), lambda i, j, k: (i, k)),
                 pl.BlockSpec((tk, tn), lambda i, j, k: (k, j))]
    if has_post:
        operands += [post_s, post_t]
        in_specs += [pl.BlockSpec((1, tn), lambda i, j, k: (0, j)),
                     pl.BlockSpec((1, tn), lambda i, j, k: (0, j))]
    return pl.pallas_call(
        _make_matmul_kernel(has_pre, pre_relu, has_post, post_relu),
        out_shape=jax.ShapeDtypeStruct((Mp, Np), jnp.float32),
        grid_spec=pltpu.PrefetchScalarGridSpec(
            num_scalar_prefetch=0,
            grid=(Mp // tm, Np // tn, Kp // tk),
            in_specs=in_specs,
            out_specs=pl.BlockSpec((tm, tn), lambda i, j, k: (i, j)),
            scratch_shapes=[pltpu.VMEM((tm, tn), jnp.float32)],
        ),
        compiler_params=pltpu.CompilerParams(
            dimension_semantics=("parallel", "parallel", "arbitrary")),
    )(*operands)


def fused_matmul(a, wspec, pre_scale=None, pre_shift=None, pre_relu=False,
                 post_scale=None, post_shift=None, post_relu=False):
    """out = [ReLU]( [post-affine]( preop(a) @ W ) ), preop = [ReLU](a*scale+shift).

    `wspec` comes from prep_weight(): weight pre-padded to the 128-tile grid, bf16.
    """
    b = wspec["w"]
    N = wspec["n"]
    M, K = a.shape
    Kp, Np = b.shape
    if M >= 1024:
        tm = 256
    elif M >= 128:
        tm = 128
    else:
        tm = _round_up(M, 8)
    tn = _pick_tile(Np, (256, 128))
    tk = _pick_tile(Kp, (512, 384, 256, 128))
    Mp = _round_up(M, tm)

    a = a.astype(jnp.float32)
    if Mp != M or Kp != K:
        a = jnp.pad(a, ((0, Mp - M), (0, Kp - K)))
    has_pre = pre_scale is not None
    has_post = post_scale is not None
    pre_s = pre_t = post_s = post_t = None
    if has_pre:
        pre_s = jnp.pad(pre_scale.astype(jnp.float32), (0, Kp - K)).reshape(1, Kp)
        pre_t = jnp.pad(pre_shift.astype(jnp.float32), (0, Kp - K)).reshape(1, Kp)
    if has_post:
        post_s = jnp.pad(post_scale.astype(jnp.float32), (0, Np - N)).reshape(1, Np)
        post_t = jnp.pad(post_shift.astype(jnp.float32), (0, Np - N)).reshape(1, Np)

    out = _matmul_padded(a, b, pre_s, pre_t, post_s, post_t,
                         has_pre=has_pre, pre_relu=pre_relu,
                         has_post=has_post, post_relu=post_relu,
                         tm=tm, tn=tn, tk=tk)
    if Mp != M or Np != N:
        out = out[:M, :N]
    return out


def _make_bn_act_kernel(relu):
    def kernel(x_ref, s_ref, t_ref, o_ref):
        y = x_ref[...] * s_ref[...] + t_ref[...]
        if relu:
            y = jnp.maximum(y, 0.0)
        o_ref[...] = y
    return kernel


@functools.partial(jax.jit, static_argnames=("relu",))
def bn_act(x2d, scale, shift, relu):
    # Only used for norm5 (tiny 50x1920 map); all other BNs are fused into matmuls.
    M, C = x2d.shape
    return pl.pallas_call(
        _make_bn_act_kernel(relu),
        out_shape=jax.ShapeDtypeStruct((M, C), jnp.float32),
    )(x2d.astype(jnp.float32), scale.reshape(1, C), shift.reshape(1, C))


def _make_pool_kernel(op):
    def kernel(x_ref, o_ref):
        x = x_ref[...]
        if op == "max":
            o_ref[...] = jnp.max(x, axis=0)
        else:
            o_ref[...] = jnp.mean(x, axis=0)
    return kernel


@functools.partial(jax.jit, static_argnames=("op", "tr"))
def _pool_reduce(stacked, op, tr):
    W, Mp, C = stacked.shape
    return pl.pallas_call(
        _make_pool_kernel(op),
        out_shape=jax.ShapeDtypeStruct((Mp, C), jnp.float32),
        grid_spec=pltpu.PrefetchScalarGridSpec(
            num_scalar_prefetch=0,
            grid=(Mp // tr,),
            in_specs=[pl.BlockSpec((W, tr, C), lambda i: (0, i, 0))],
            out_specs=pl.BlockSpec((tr, C), lambda i: (i, 0)),
        ),
        compiler_params=pltpu.CompilerParams(dimension_semantics=("parallel",)),
    )(stacked)


def _pool_rows(stacked, op):
    _, M, _ = stacked.shape
    tr = min(512, _round_up(M, 8))
    Mp = _round_up(M, tr)
    if Mp != M:
        stacked = jnp.pad(stacked, ((0, 0), (0, Mp - M), (0, 0)))
    out = _pool_reduce(stacked.astype(jnp.float32), op=op, tr=tr)
    return out[:M] if Mp != M else out


def _fc_kernel(x_ref, w0_ref, b0_ref, w1_ref, b1_ref, w2_ref, b2_ref, o_ref):
    h = jnp.dot(x_ref[...], w0_ref[...], preferred_element_type=jnp.float32) + b0_ref[...]
    h = jnp.maximum(h, 0.0)                       # fc0: Linear + (eval) Dropout + ReLU
    h = jnp.dot(h, w1_ref[...], preferred_element_type=jnp.float32) + b1_ref[...]
    h = jnp.maximum(h, 0.0)                       # fc1: Linear + (eval) Dropout + ReLU
    z = jnp.dot(h, w2_ref[...], preferred_element_type=jnp.float32) + b2_ref[...]
    o_ref[...] = jax.nn.sigmoid(z)                # fc2: Linear + Sigmoid


@jax.jit
def _fc_head_padded(xp, w0, b0, w1, b1, w2, b2):
    return pl.pallas_call(
        _fc_kernel, out_shape=jax.ShapeDtypeStruct((xp.shape[0], 128), jnp.float32)
    )(xp, w0, b0, w1, b1, w2, b2)


# ---------------------------------------------------------------------------
# Glue: im2col / pooling window extraction (pure data movement)
# ---------------------------------------------------------------------------

def im2col(x, kh, kw, stride, pad):
    N, H, W, C = x.shape
    Ho = (H + 2 * pad - kh) // stride + 1
    Wo = (W + 2 * pad - kw) // stride + 1
    xp = jnp.pad(x, ((0, 0), (pad, pad), (pad, pad), (0, 0)))
    cols = []
    for dy in range(kh):
        for dx in range(kw):
            cols.append(xp[:, dy:dy + stride * Ho:stride, dx:dx + stride * Wo:stride, :])
    col = jnp.stack(cols, axis=3)                       # (N, Ho, Wo, kh*kw, C)
    return col.reshape(N * Ho * Wo, kh * kw * C), Ho, Wo


def max_pool_3x3_s2_p1(x):
    N, H, W, C = x.shape
    Ho = (H + 2 - 3) // 2 + 1
    Wo = (W + 2 - 3) // 2 + 1
    xp = jnp.pad(x, ((0, 0), (1, 1), (1, 1), (0, 0)), constant_values=-jnp.inf)
    parts = [xp[:, dy:dy + 2 * Ho:2, dx:dx + 2 * Wo:2, :]
             for dy in range(3) for dx in range(3)]
    stacked = jnp.stack(parts, axis=0).reshape(9, N * Ho * Wo, C)
    return _pool_rows(stacked, "max").reshape(N, Ho, Wo, C)


def avg_pool_2x2_s2(x):
    N, H, W, C = x.shape
    Ho, Wo = H // 2, W // 2
    parts = [x[:, dy::2, dx::2, :] for dy in range(2) for dx in range(2)]
    stacked = jnp.stack(parts, axis=0).reshape(4, N * Ho * Wo, C)
    return _pool_rows(stacked, "mean").reshape(N, Ho, Wo, C)


# ---------------------------------------------------------------------------
# Parameters (deterministic synthetic init)
# ---------------------------------------------------------------------------

def init_bn(c):
    return dict(gamma=jnp.ones((c,), jnp.float32), beta=jnp.zeros((c,), jnp.float32),
                mean=jnp.zeros((c,), jnp.float32), var=jnp.ones((c,), jnp.float32))


def bn_affine(p):
    scale = p["gamma"] / jnp.sqrt(p["var"] + BN_EPS)
    shift = p["beta"] - p["mean"] * scale
    return scale, shift


def init_conv(key, kh, kw, cin, cout):
    fan_in = kh * kw * cin
    w = jax.random.normal(key, (kh * kw * cin, cout), jnp.float32)
    return w * jnp.float32(math.sqrt(2.0 / fan_in))


def prep_weight(w):
    """Pad once to the (128,128) tile grid and cast to bf16 for the MXU."""
    K, N = w.shape
    Kp, Np = _round_up(K, 128), _round_up(N, 128)
    wp = jnp.pad(w, ((0, Kp - K), (0, Np - N))).astype(jnp.bfloat16)
    return dict(w=wp, n=N)


def init_linear(key, fin, fout):
    k1, k2 = jax.random.split(key)
    bound = 1.0 / math.sqrt(fin)
    w = jax.random.uniform(k1, (fin, fout), jnp.float32, -bound, bound)
    b = jax.random.uniform(k2, (fout,), jnp.float32, -bound, bound)
    return w, b


def build_params(key):
    keys = iter(jax.random.split(key, 512))
    p = {}
    p["conv0"] = prep_weight(init_conv(next(keys), 7, 7, 5, 64))   # custom 5-channel stem
    p["norm0"] = init_bn(64)
    block_config = (6, 12, 48, 32)                                 # densenet201
    growth, bn_size = 32, 4
    chans = 64
    p["blocks"], p["transitions"] = [], []
    for bi, num_layers in enumerate(block_config):
        layers = []
        for li in range(num_layers):
            cin = chans + li * growth
            layers.append(dict(
                norm1=init_bn(cin),
                conv1=prep_weight(init_conv(next(keys), 1, 1, cin, bn_size * growth)),
                norm2=init_bn(bn_size * growth),
                conv2=prep_weight(init_conv(next(keys), 3, 3, bn_size * growth, growth)),
            ))
        p["blocks"].append(layers)
        chans += num_layers * growth
        if bi != len(block_config) - 1:
            p["transitions"].append(dict(
                norm=init_bn(chans),
                conv=prep_weight(init_conv(next(keys), 1, 1, chans, chans // 2)),
            ))
            chans //= 2
    p["norm5"] = init_bn(chans)                                    # 1920 channels
    p["conv1"] = prep_weight(init_conv(next(keys), 7, 7, 1920, 512))
    p["conv2"] = prep_weight(init_conv(next(keys), 7, 7, 512, 128))
    p["fc0_w"], p["fc0_b"] = init_linear(next(keys), 512, 128)
    p["fc1_w"], p["fc1_b"] = init_linear(next(keys), 128, 32)
    p["fc2_w"], p["fc2_b"] = init_linear(next(keys), 32, 1)        # args.dichot = False
    return p


# ---------------------------------------------------------------------------
# Forward pass
# ---------------------------------------------------------------------------

def dense_layer(x, lp):
    N, H, W, C = x.shape
    s1, t1 = bn_affine(lp["norm1"])
    s2, t2 = bn_affine(lp["norm2"])
    a = x.reshape(N * H * W, C)
    # norm1+ReLU fused as the per-K-column pre-affine of the 1x1 conv (no padding
    # involved -> exact); norm2+ReLU fused as the per-N-column epilogue (also exact:
    # the 3x3 conv's zero padding happens after this fused output).
    h = fused_matmul(a, lp["conv1"], pre_scale=s1, pre_shift=t1, pre_relu=True,
                     post_scale=s2, post_shift=t2, post_relu=True)
    h = h.reshape(N, H, W, -1)
    col, Ho, Wo = im2col(h, 3, 3, 1, 1)
    new = fused_matmul(col, lp["conv2"]).reshape(N, Ho, Wo, -1)
    return jnp.concatenate([x, new], axis=-1)


def transition(x, tp):
    N, H, W, C = x.shape
    s, t = bn_affine(tp["norm"])
    a = x.reshape(N * H * W, C)
    h = fused_matmul(a, tp["conv"], pre_scale=s, pre_shift=t, pre_relu=True)
    return avg_pool_2x2_s2(h.reshape(N, H, W, -1))


def fc_head(x_flat, p):
    bs = x_flat.shape[0]
    bsp = _round_up(bs, 8)                                         # works for any bs
    xp = jnp.pad(x_flat.astype(jnp.float32), ((0, bsp - bs), (0, 0)))
    w1 = jnp.pad(p["fc1_w"], ((0, 0), (0, 128 - 32)))              # pad hidden 32 -> 128
    b1 = jnp.pad(p["fc1_b"], (0, 128 - 32)).reshape(1, 128)
    w2 = jnp.pad(p["fc2_w"], ((0, 128 - 32), (0, 128 - 1)))        # pad out 1 -> 128
    b2 = jnp.pad(p["fc2_b"], (0, 128 - 1)).reshape(1, 128)
    out = _fc_head_padded(xp, p["fc0_w"], p["fc0_b"].reshape(1, 128), w1, b1, w2, b2)
    return out[:bs, :1]


def densenet_forward(x_nchw, p):
    x = jnp.transpose(x_nchw.astype(jnp.float32), (0, 2, 3, 1))    # NCHW -> NHWC
    N = x.shape[0]
    # conv0 (5->64, 7x7/2, pad3, no bias) with norm0+ReLU fused as epilogue
    col, Ho, Wo = im2col(x, 7, 7, 2, 3)
    s0, t0 = bn_affine(p["norm0"])
    h = fused_matmul(col, p["conv0"], post_scale=s0, post_shift=t0, post_relu=True)
    h = max_pool_3x3_s2_p1(h.reshape(N, Ho, Wo, 64))
    # dnet_pass = densenet201.features[1:]
    for bi in range(4):
        for lp in p["blocks"][bi]:
            h = dense_layer(h, lp)
        if bi < 3:
            h = transition(h, p["transitions"][bi])
    Nn, Hh, Ww, Cc = h.shape
    s, t = bn_affine(p["norm5"])                                   # features end: norm5, no ReLU
    h = bn_act(h.reshape(Nn * Hh * Ww, Cc), s, t, relu=False).reshape(Nn, Hh, Ww, Cc)
    # conv1 (1920->512) + ReLU
    col, Ho, Wo = im2col(h, 7, 7, 2, 3)
    h = fused_matmul(col, p["conv1"], post_relu=True).reshape(Nn, Ho, Wo, 512)
    # conv2 (512->128) + ReLU
    col, Ho, Wo = im2col(h, 7, 7, 2, 3)
    h = fused_matmul(col, p["conv2"], post_relu=True).reshape(Nn, Ho, Wo, 128)
    # x4.view([bs, 1, -1]) in PyTorch flattens NCHW order -> transpose back then flatten
    x_flat = jnp.transpose(h, (0, 3, 1, 2)).reshape(Nn, -1)        # (bs, 512)
    out = fc_head(x_flat, p)                                       # (bs, 1)
    return out.reshape(Nn, 1, 1)                                   # matches torch [bs, 1, 1]


if __name__ == "__main__":
    key = jax.random.PRNGKey(0)
    pkey, xkey = jax.random.split(key)
    params = build_params(pkey)
    # bs=2, 5 channels, 160x160: smallest square input for which conv2's output
    # flattens to exactly the 512 features that Linear(512,128) requires.
    x = jax.random.normal(xkey, (2, 5, 160, 160), jnp.float32)
    y = densenet_forward(x, params)
    y = jax.block_until_ready(y)
    assert y.shape == (2, 1, 1), y.shape
    print("KERNEL_OK")
</pallas_src>

<mosaic_0001>
module attributes {stable_mosaic.version = 11 : i64} {
  func.func @kernel(%arg0: i32, %arg1: i32, %arg2: i32, %arg3: memref<256x256xf32, #tpu.memory_space<vmem>>, %arg4: memref<256x128xbf16, #tpu.memory_space<vmem>>, %arg5: memref<1x128xf32, #tpu.memory_space<vmem>>, %arg6: memref<1x128xf32, #tpu.memory_space<vmem>>, %arg7: memref<256x128xf32, #tpu.memory_space<vmem>>, %arg8: memref<256x128xf32, #tpu.memory_space<vmem>>) attributes {dimension_semantics = [#tpu.dimension_semantics<parallel>, #tpu.dimension_semantics<parallel>, #tpu.dimension_semantics<arbitrary>], iteration_bounds = array<i64: 50, 1, 1>, scalar_prefetch = 0 : i64, scratch_operands = 1 : i64, tpu.core_type = #tpu.core_type<tc>, window_params = [{transform_indices = @transform_0, window_bounds = array<i64: 256, 256>}, {transform_indices = @transform_1, window_bounds = array<i64: 256, 128>}, {transform_indices = @transform_2, window_bounds = array<i64: 1, 128>}, {transform_indices = @transform_3, window_bounds = array<i64: 1, 128>}, {transform_indices = @transform_4, window_bounds = array<i64: 256, 128>}]} {
    %c0_i32 = arith.constant 0 : i32
    %0 = arith.cmpi eq, %arg2, %c0_i32 : i32
    %1 = arith.extui %0 : i1 to i32
    %c0_i32_0 = arith.constant 0 : i32
    %2 = arith.cmpi ne, %1, %c0_i32_0 : i32
    scf.if %2 {
      %cst_10 = arith.constant 0.000000e+00 : f32
      %13 = vector.broadcast %cst_10 : f32 to vector<256x128xf32>
      %c0_11 = arith.constant 0 : index
      %c0_12 = arith.constant 0 : index
      %14 = vector.load %arg8[%c0_11, %c0_12] : memref<256x128xf32, #tpu.memory_space<vmem>>, vector<256x128xf32>
      tpu.vector_store %arg8[%c0_11, %c0_12], %13 {strides = array<i32>} : memref<256x128xf32, #tpu.memory_space<vmem>>, vector<256x128xf32>,
    } else {
    }
    %c0 = arith.constant 0 : index
    %c0_1 = arith.constant 0 : index
    %3 = vector.load %arg3[%c0, %c0_1] : memref<256x256xf32, #tpu.memory_space<vmem>>, vector<256x256xf32>
    %c0_2 = arith.constant 0 : index
    %c0_3 = arith.constant 0 : index
    %4 = vector.load %arg8[%c0_2, %c0_3] : memref<256x128xf32, #tpu.memory_space<vmem>>, vector<256x128xf32>
    %5 = arith.truncf %3 : vector<256x256xf32> to vector<256x256xbf16>
    %c0_4 = arith.constant 0 : index
    %c0_5 = arith.constant 0 : index
    %6 = vector.load %arg4[%c0_4, %c0_5] : memref<256x128xbf16, #tpu.memory_space<vmem>>, vector<256x128xbf16>
    %cst = arith.constant dense<0.000000e+00> : vector<256x128xf32>
    %7 = tpu.matmul %5, %6, %cst {dimension_numbers = #tpu.dot_dimension_numbers<[1], [0], [0], [1], [0, 0, 1, 1], [], []>} : vector<256x256xbf16>, vector<256x128xbf16>, vector<256x128xf32> -> vector<256x128xf32>
    %8 = arith.addf %4, %7 : vector<256x128xf32>
    %c0_6 = arith.constant 0 : index
    %c0_7 = arith.constant 0 : index
    %9 = vector.load %arg8[%c0_6, %c0_7] : memref<256x128xf32, #tpu.memory_space<vmem>>, vector<256x128xf32>
    tpu.vector_store %arg8[%c0_6, %c0_7], %8 {strides = array<i32>} : memref<256x128xf32, #tpu.memory_space<vmem>>, vector<256x128xf32>,
    %c0_i32_8 = arith.constant 0 : i32
    %10 = arith.cmpi eq, %arg2, %c0_i32_8 : i32
    %11 = arith.extui %10 : i1 to i32
    %c0_i32_9 = arith.constant 0 : i32
    %12 = arith.cmpi ne, %11, %c0_i32_9 : i32
    scf.if %12 {
      %c0_10 = arith.constant 0 : index
      %c0_11 = arith.constant 0 : index
      %13 = vector.load %arg8[%c0_10, %c0_11] : memref<256x128xf32, #tpu.memory_space<vmem>>, vector<256x128xf32>
      %c0_12 = arith.constant 0 : index
      %c0_13 = arith.constant 0 : index
      %14 = vector.load %arg5[%c0_12, %c0_13] : memref<1x128xf32, #tpu.memory_space<vmem>>, vector<1x128xf32>
      %15 = vector.broadcast %14 : vector<1x128xf32> to vector<256x128xf32>
      %16 = arith.mulf %13, %15 : vector<256x128xf32>
      %c0_14 = arith.constant 0 : index
      %c0_15 = arith.constant 0 : index
      %17 = vector.load %arg6[%c0_14, %c0_15] : memref<1x128xf32, #tpu.memory_space<vmem>>, vector<1x128xf32>
      %18 = vector.broadcast %17 : vector<1x128xf32> to vector<256x128xf32>
      %19 = arith.addf %16, %18 : vector<256x128xf32>
      %cst_16 = arith.constant 0.000000e+00 : f32
      %20 = vector.broadcast %cst_16 : f32 to vector<256x128xf32>
      %21 = arith.maximumf %19, %20 : vector<256x128xf32>
      %c0_17 = arith.constant 0 : index
      %c0_18 = arith.constant 0 : index
      %22 = vector.load %arg7[%c0_17, %c0_18] : memref<256x128xf32, #tpu.memory_space<vmem>>, vector<256x128xf32>
      tpu.vector_store %arg7[%c0_17, %c0_18], %21 {strides = array<i32>} : memref<256x128xf32, #tpu.memory_space<vmem>>, vector<256x128xf32>,
    } else {
    }
    return
  }
  func.func @transform_0(%arg0: i32, %arg1: i32, %arg2: i32) -> (i32, i32) {
    %c0_i32 = arith.constant 0 : i32
    return %arg0, %arg2 : i32, i32
  }
  func.func @transform_1(%arg0: i32, %arg1: i32, %arg2: i32) -> (i32, i32) {
    %c0_i32 = arith.constant 0 : i32
    return %arg2, %arg1 : i32, i32
  }
  func.func @transform_2(%arg0: i32, %arg1: i32, %arg2: i32) -> (i32, i32) {
    %c0_i32 = arith.constant 0 : i32
    %c0_i32_0 = arith.constant 0 : i32
    return %c0_i32, %arg1 : i32, i32
  }
  func.func @transform_3(%arg0: i32, %arg1: i32, %arg2: i32) -> (i32, i32) {
    %c0_i32 = arith.constant 0 : i32
    %c0_i32_0 = arith.constant 0 : i32
    return %c0_i32, %arg1 : i32, i32
  }
  func.func @transform_4(%arg0: i32, %arg1: i32, %arg2: i32) -> (i32, i32) {
    %c0_i32 = arith.constant 0 : i32
    return %arg0, %arg1 : i32, i32
  }
}

</mosaic_0001>

<llo_original>
// kernel: _matmul_padded.1
$region0: #{_matmul_padded.1}
  #allocation0 [shape = 'u32[]', space=smem, size = 0x4, offset = 0x4, fixed_abs, tag = 'smem constant byte address 0x4 - core index']
  #allocation1 [shape = 'u32[144,128]{1,0:T(1,128)}', space=vmem, size = 0x12000, scoped, tag = 'internal scratch']
  #allocation2 [shape = 'f32[256,128]{1,0:T(8,128)}', space=vmem, size = 0x20000, scoped, tag = 'scratch operand']
  %s0 = inlined_call_operand.hbm [shape: f32[12800,256], index: 0, kind: input, shape index: {}]
  %s1 = inlined_call_operand.hbm [shape: bf16[256,128], index: 1, kind: input, shape index: {}]
  %s2 = inlined_call_operand.hbm [shape: f32[1,128], index: 2, kind: input, shape index: {}]
  %s3 = inlined_call_operand.hbm [shape: f32[1,128], index: 3, kind: input, shape index: {}]
  %s4 = inlined_call_operand.hbm [shape: f32[12800,128], index: 4, kind: output, shape index: {}]
  %s5 = sld [smem:[#allocation0]]
  $region73: #{_matmul_padded.1} parent=0
    _
  %s7 = ssub.s32 1, %s5
  %s8 = scalar_select 0, %s7, %s5
  $region1: #{_matmul_padded.1} parent=0
    #allocation3 [shape = 'u8[524288]{0}', space=vmem, size = 0x80000, scoped, tag = 'input window, operand 0']
    #allocation4 [shape = 's32[2]{0}', space=sflag, size = 0x8, scoped, tag = 'scoped memory for _matmul_padded.1']
    #allocation5 [shape = 's32[2]{0}', space=sflag, size = 0x8, scoped, tag = 'scoped memory for _matmul_padded.1']
    #allocation6 [shape = 'u8[65536]{0}', space=vmem, size = 0x10000, scoped, tag = 'input window, operand 1, single buffered']
    #allocation7 [shape = 's32[1]{0}', space=sflag, size = 0x4, scoped, tag = 'scoped memory for _matmul_padded.1']
    #allocation8 [shape = 'u8[512]{0}', space=vmem, size = 0x400, scoped, tag = 'input window, operand 2, single buffered']
    #allocation9 [shape = 'u8[512]{0}', space=vmem, size = 0x400, scoped, tag = 'input window, operand 3, single buffered']
    #allocation10 [shape = 's32[1]{0}', space=sflag, size = 0x4, scoped, tag = 'scoped memory for _matmul_padded.1']
    #allocation11 [shape = 'u8[262144]{0}', space=vmem, size = 0x40000, scoped, tag = 'output window, operand 0']
    %9 = vsyncpa [#allocation4], 0
    %s10 = scalar_lea.sflag [#allocation4], 1
    %11 = vsyncpa %s10, 0
    %12 = vsyncpa [#allocation7], 0
    %13 = vsyncpa [#allocation10], 0
    %14 = vsyncpa [#allocation5], 0
    %s15 = scalar_lea.sflag [#allocation5], 1
    %16 = vsyncpa %s15, 0
    loop: start=0, step=1, limit=52
    $region2: #{_matmul_padded.1} parent=1 // loop_pre_header
      _
    $region3: #{_matmul_padded.1} parent=1 // loop_header
      %s18 = sphi 0, %s22
      %p19 = scmp.ge.s32.totalorder %s18, 52
      %s25 = sphi 0, %s44
      %s26 = sphi 0, %s40
      %s27 = sphi 0, %s36
      %s28 = sphi 0, %s25
      %s29 = sphi 0, %s26
      %s30 = sphi 0, %s27
      %s31 = sphi 0, %s28
      %s32 = sphi 0, %s29
      %s33 = sphi 0, %s30
      %s49 = sphi 0, %s51
      %s52 = sphi 0, %s49
      %s53 = sphi 0, %s52
      %s69 = sphi 0, %s53
      %s77 = sphi 0, %s79
      %s80 = sphi 0, %s77
      %s81 = sphi 0, %s80
      %s97 = sphi 0, %s81
      %s103 = sphi 0, %s105
      %s106 = sphi 0, %s103
      %s107 = sphi 0, %s106
      %s123 = sphi 0, %s107
      %s129 = sphi 0, %s131
      %s132 = sphi 0, %s129
      %s133 = sphi 0, %s132
      %s149 = sphi 0, %s133
      %s157 = sphi 0, %s159
      %s160 = sphi 0, %s157
      %s161 = sphi 0, %s160
      %s177 = sphi 0, %s161
    $region4: #{_matmul_padded.1} parent=1 // loop_header_branch
      %21 = sbr.rel (%p19) target = $region8
    $region5: #{_matmul_padded.1} parent=1 // loop_body
      %s23 = ssub.s32 %s18, 1
      %s24 = ssub.s32 %s18, 2
      %s34 = sadd.s32 1, %s27
      %p35 = scmp.ge.s32.totalorder %s34, 1
      %s36 = scalar_select %p35, 0, %s34
      %s37 = sadd.s32 1, %s26
      %s38 = scalar_select %p35, %s37, %s26
      %p39 = scmp.ge.s32.totalorder %s38, 1
      %s40 = scalar_select %p39, 0, %s38
      %s41 = sadd.s32 1, %s25
      %s42 = scalar_select %p39, %s41, %s25
      %p43 = scmp.ge.s32.totalorder %s42, 50
      %s44 = scalar_select %p43, 0, %s42
      %s45 = ssub.s32 %s25, %s44
      %s46 = ssub.s32 %s27, %s36
      %s47 = sor.u32 %s45, %s46
      %p48 = scmp.eq.s32.totalorder %s47, 0
      %s50 = sadd.s32 %s49, 1
      %s51 = scalar_select %p48, %s49, %s50
      %p54 = pneg %p48
      %p55 = scmp.eq.s32.totalorder %s18, 49
      %p56 = por %p54, %p55
      %p57 = scmp.ne.s32.totalorder %s49, %s52
      %p58 = scmp.eq.s32.totalorder %s18, 0
      %p59 = por %p57, %p58
      %p60 = scmp.ne.s32.totalorder %s49, %s52
      %p61 = scmp.eq.s32.totalorder %s23, 49
      %p62 = por %p60, %p61
      %p63 = scmp.ne.s32.totalorder %s52, %s53
      %p64 = scmp.eq.s32.totalorder %s23, 0
      %p65 = por %p63, %p64
      %p66 = scmp.ne.s32.totalorder %s52, %s53
      %p67 = scmp.eq.s32.totalorder %s24, 49
      %p68 = por %p66, %p67
      %p70 = scmp.ne.s32.totalorder %s53, %s69
      %p71 = scmp.eq.s32.totalorder %s24, 0
      %p72 = por %p70, %p71
      %s73 = ssub.s32 %s27, %s36
      %s74 = ssub.s32 %s26, %s40
      %s75 = sor.u32 %s73, %s74
      %p76 = scmp.eq.s32.totalorder %s75, 0
      %s78 = sadd.s32 %s77, 1
      %s79 = scalar_select %p76, %s77, %s78
      %p82 = pneg %p76
      %p83 = scmp.eq.s32.totalorder %s18, 49
      %p84 = por %p82, %p83
      %p85 = scmp.ne.s32.totalorder %s77, %s80
      %p86 = scmp.eq.s32.totalorder %s18, 0
      %p87 = por %p85, %p86
      %p88 = scmp.ne.s32.totalorder %s77, %s80
      %p89 = scmp.eq.s32.totalorder %s23, 49
      %p90 = por %p88, %p89
      %p91 = scmp.ne.s32.totalorder %s80, %s81
      %p92 = scmp.eq.s32.totalorder %s23, 0
      %p93 = por %p91, %p92
      %p94 = scmp.ne.s32.totalorder %s80, %s81
      %p95 = scmp.eq.s32.totalorder %s24, 49
      %p96 = por %p94, %p95
      %p98 = scmp.ne.s32.totalorder %s81, %s97
      %p99 = scmp.eq.s32.totalorder %s24, 0
      %p100 = por %p98, %p99
      %s101 = ssub.s32 %s26, %s40
      %p102 = scmp.eq.s32.totalorder %s101, 0
      %s104 = sadd.s32 %s103, 1
      %s105 = scalar_select %p102, %s103, %s104
      %p108 = pneg %p102
      %p109 = scmp.eq.s32.totalorder %s18, 49
      %p110 = por %p108, %p109
      %p111 = scmp.ne.s32.totalorder %s103, %s106
      %p112 = scmp.eq.s32.totalorder %s18, 0
      %p113 = por %p111, %p112
      %p114 = scmp.ne.s32.totalorder %s103, %s106
      %p115 = scmp.eq.s32.totalorder %s23, 49
      %p116 = por %p114, %p115
      %p117 = scmp.ne.s32.totalorder %s106, %s107
      %p118 = scmp.eq.s32.totalorder %s23, 0
      %p119 = por %p117, %p118
      %p120 = scmp.ne.s32.totalorder %s106, %s107
      %p121 = scmp.eq.s32.totalorder %s24, 49
      %p122 = por %p120, %p121
      %p124 = scmp.ne.s32.totalorder %s107, %s123
      %p125 = scmp.eq.s32.totalorder %s24, 0
      %p126 = por %p124, %p125
      %s127 = ssub.s32 %s26, %s40
      %p128 = scmp.eq.s32.totalorder %s127, 0
      %s130 = sadd.s32 %s129, 1
      %s131 = scalar_select %p128, %s129, %s130
      %p134 = pneg %p128
      %p135 = scmp.eq.s32.totalorder %s18, 49
      %p136 = por %p134, %p135
      %p137 = scmp.ne.s32.totalorder %s129, %s132
      %p138 = scmp.eq.s32.totalorder %s18, 0
      %p139 = por %p137, %p138
      %p140 = scmp.ne.s32.totalorder %s129, %s132
      %p141 = scmp.eq.s32.totalorder %s23, 49
      %p142 = por %p140, %p141
      %p143 = scmp.ne.s32.totalorder %s132, %s133
      %p144 = scmp.eq.s32.totalorder %s23, 0
      %p145 = por %p143, %p144
      %p146 = scmp.ne.s32.totalorder %s132, %s133
      %p147 = scmp.eq.s32.totalorder %s24, 49
      %p148 = por %p146, %p147
      %p150 = scmp.ne.s32.totalorder %s133, %s149
      %p151 = scmp.eq.s32.totalorder %s24, 0
      %p152 = por %p150, %p151
      %s153 = ssub.s32 %s25, %s44
      %s154 = ssub.s32 %s26, %s40
      %s155 = sor.u32 %s153, %s154
      %p156 = scmp.eq.s32.totalorder %s155, 0
      %s158 = sadd.s32 %s157, 1
      %s159 = scalar_select %p156, %s157, %s158
      %p162 = pneg %p156
      %p163 = scmp.eq.s32.totalorder %s18, 49
      %p164 = por %p162, %p163
      %p165 = scmp.ne.s32.totalorder %s157, %s160
      %p166 = scmp.eq.s32.totalorder %s18, 0
      %p167 = por %p165, %p166
      %p168 = scmp.ne.s32.totalorder %s157, %s160
      %p169 = scmp.eq.s32.totalorder %s23, 49
      %p170 = por %p168, %p169
      %p171 = scmp.ne.s32.totalorder %s160, %s161
      %p172 = scmp.eq.s32.totalorder %s23, 0
      %p173 = por %p171, %p172
      %p174 = scmp.ne.s32.totalorder %s160, %s161
      %p175 = scmp.eq.s32.totalorder %s24, 49
      %p176 = por %p174, %p175
      %p178 = scmp.ne.s32.totalorder %s161, %s177
      %p179 = scmp.eq.s32.totalorder %s24, 0
      %p180 = por %p178, %p179
      %p181 = scmp.le.s32.totalorder 1, %s18
      %p182 = scmp.lt.s32.totalorder %s18, 51
      %p183 = pnand %p181, %p182
      %p184 = pneg %p183
      // Predicated region
      $region9: #{_matmul_padded.1} parent=5 // pred_check
        _
      $region10: #{_matmul_padded.1} parent=5 // pred_check_branch
        %186 = sbr.rel (%p183) target = $region12
      $region11: #{_matmul_padded.1} parent=5 // pred_region
        %s187 = ssub.s32 %s18, 1
        // Predicated region
        $region13: #{_matmul_padded.1} parent=11 // pred_check
          %p188 = pneg %p93
        $region14: #{_matmul_padded.1} parent=11 // pred_check_branch
          %190 = sbr.rel (%p188) target = $region16
        $region15: #{_matmul_padded.1} parent=11 // pred_region
          %s191 = smul.u32 32, %s30
          %s193 = ssub.s32 2048, 2048
          %194 = vsyncadd [#allocation7], %s193
          %s195 = sadd.s32 %s29, %s191
          %s196 = smul.addr %s195, 64
          %s197 = scalar_lea.hbm %s1, %s196
          %s198 = sshll.u32 [#allocation6], 4
          %s199 = int_to_ptr.vmem [resolvable:$true] %s198
          %204 = dma.hbm_to_vmem [thread:$0]  %s197, 2048, %s199, [#allocation7], 64, 64, 4
        $region16: #{_matmul_padded.1} parent=11 // pred_fallthru
          _
        // Predicated region
        $region17: #{_matmul_padded.1} parent=11 // pred_check
          %p205 = pneg %p119
        $region18: #{_matmul_padded.1} parent=11 // pred_check_branch
          %207 = sbr.rel (%p205) target = $region20
        $region19: #{_matmul_padded.1} parent=11 // pred_region
          %s209 = ssub.s32 16, 16
          %210 = vsyncadd [#allocation7], %s209
          %s211 = smul.addr %s29, 16
          %s212 = scalar_lea.hbm %s2, %s211
          %s214 = sshll.u32 [#allocation8], 4
          %s215 = int_to_ptr.vmem [resolvable:$true] %s214
          %217 = dma.hbm_to_vmem [thread:$0]  %s212, 16, %s215, [#allocation7]
        $region20: #{_matmul_padded.1} parent=11 // pred_fallthru
          _
        // Predicated region
        $region21: #{_matmul_padded.1} parent=11 // pred_check
          %p218 = pneg %p145
        $region22: #{_matmul_padded.1} parent=11 // pred_check_branch
          %220 = sbr.rel (%p218) target = $region24
        $region23: #{_matmul_padded.1} parent=11 // pred_region
          %s222 = ssub.s32 16, 16
          %223 = vsyncadd [#allocation10], %s222
          %s224 = smul.addr %s29, 16
          %s225 = scalar_lea.hbm %s3, %s224
          %s227 = sshll.u32 [#allocation9], 4
          %s228 = int_to_ptr.vmem [resolvable:$true] %s227
          %230 = dma.hbm_to_vmem [thread:$0]  %s225, 16, %s228, [#allocation10]
        $region24: #{_matmul_padded.1} parent=11 // pred_fallthru
          _
      $region12: #{_matmul_padded.1} parent=5 // pred_fallthru
        _
      %p231 = scmp.lt.s32.totalorder %s18, 50
      // Predicated region
      $region25: #{_matmul_padded.1} parent=5 // pred_check
        %p232 = pneg %p231
      $region26: #{_matmul_padded.1} parent=5 // pred_check_branch
        %234 = sbr.rel (%p232) target = $region28
      $region27: #{_matmul_padded.1} parent=5 // pred_region
        // Predicated region
        $region29: #{_matmul_padded.1} parent=27 // pred_check
          %p235 = pneg %p59
        $region30: #{_matmul_padded.1} parent=27 // pred_check_branch
          %237 = sbr.rel (%p235) target = $region32
        $region31: #{_matmul_padded.1} parent=27 // pred_region
          %s238 = sand.u32 %s49, 1
          %s239 = scalar_lea.sflag [#allocation4], %s238
          %s240 = sand.u32 %s49, 1
          %s241 = smul.addr %s240, 512
          %s242 = scalar_lea.vmem [#allocation3], %s241
          %s243 = smul.u32 32, %s25
          %s244 = smul.u32 2, %s27
          %s246 = ssub.s32 8192, 8192
          %247 = vsyncadd %s239, %s246
          %s248 = smul.addr %s243, 2
          %s249 = sadd.s32 %s244, %s248
          %s250 = smul.addr %s249, 128
          %s251 = scalar_lea.hbm %s0, %s250
          %s252 = sshll.u32 %s242, 4
          %s253 = int_to_ptr.vmem [resolvable:$true] %s252
          %258 = dma.hbm_to_vmem [thread:$0]  %s251, 8192, %s253, %s239, 256, 256, 16
        $region32: #{_matmul_padded.1} parent=27 // pred_fallthru
          _
      $region28: #{_matmul_padded.1} parent=5 // pred_fallthru
        _
      %p259 = scmp.le.s32.totalorder 1, %s18
      %p260 = scmp.lt.s32.totalorder %s18, 51
      %p261 = pnand %p259, %p260
      %p262 = pneg %p261
      // Predicated region
      $region33: #{_matmul_padded.1} parent=5 // pred_check
        _
      $region34: #{_matmul_padded.1} parent=5 // pred_check_branch
        %264 = sbr.rel (%p261) target = $region36
      $region35: #{_matmul_padded.1} parent=5 // pred_region
        %s265 = ssub.s32 %s18, 1
        %s266 = sand.u32 %s52, 1
        %s267 = scalar_lea.sflag [#allocation4], %s266
        %s268 = sand.u32 %s52, 1
        %s269 = smul.addr %s268, 512
        %s270 = scalar_lea.vmem [#allocation3], %s269
        // Predicated region
        $region37: #{_matmul_padded.1} parent=35 // pred_check
          %p271 = pneg %p65
        $region38: #{_matmul_padded.1} parent=35 // pred_check_branch
          %273 = sbr.rel (%p271) target = $region40
        $region39: #{_matmul_padded.1} parent=35 // pred_region
          %274 = dma.done %s267, 8192
        $region40: #{_matmul_padded.1} parent=35 // pred_fallthru
          _
        // Predicated region
        $region41: #{_matmul_padded.1} parent=35 // pred_check
          %p275 = pneg %p93
        $region42: #{_matmul_padded.1} parent=35 // pred_check_branch
          %277 = sbr.rel (%p275) target = $region44
        $region43: #{_matmul_padded.1} parent=35 // pred_region
          %278 = dma.done [#allocation7], 2048
        $region44: #{_matmul_padded.1} parent=35 // pred_fallthru
          _
        // Predicated region
        $region45: #{_matmul_padded.1} parent=35 // pred_check
          %p279 = pneg %p119
        $region46: #{_matmul_padded.1} parent=35 // pred_check_branch
          %281 = sbr.rel (%p279) target = $region48
        $region47: #{_matmul_padded.1} parent=35 // pred_region
          %282 = dma.done [#allocation7], 16
        $region48: #{_matmul_padded.1} parent=35 // pred_fallthru
          _
        // Predicated region
        $region49: #{_matmul_padded.1} parent=35 // pred_check
          %p283 = pneg %p145
        $region50: #{_matmul_padded.1} parent=35 // pred_check_branch
          %285 = sbr.rel (%p283) target = $region52
        $region51: #{_matmul_padded.1} parent=35 // pred_region
          %286 = dma.done [#allocation10], 16
        $region52: #{_matmul_padded.1} parent=35 // pred_fallthru
          _
        %s287 = sand.u32 %s52, 1
        %s288 = scalar_lea.sflag [#allocation4], %s287
        %s289 = sand.u32 %s52, 1
        %s290 = smul.addr %s289, 512
        %s291 = scalar_lea.vmem [#allocation3], %s290
        %p292 = pneg %p65
        %p293 = pneg %p62
        %p294 = pneg %p93
        %p295 = pneg %p90
        %p296 = pneg %p119
        %p297 = pneg %p116
        %p298 = pneg %p145
        %p299 = pneg %p142
        %p300 = pneg %p173
        %p301 = pneg %p170
        %s302 = sand.u32 %s160, 1
        %s303 = scalar_lea.sflag [#allocation5], %s302
        %s304 = sand.u32 %s160, 1
        %s305 = smul.addr %s304, 256
        %s306 = scalar_lea.vmem [#allocation11], %s305
        %s307 = smul.u32 32, %s28
        %s308 = smul.u32 2, %s30
        %s309 = smul.u32 32, %s30
        %s310 = smul.u32 32, %s28
        %p312 = scmp.eq.s32.totalorder %s30, 0
        // Predicated region
        $region53: #{_matmul_padded.1} parent=35 // pred_check
          %p313 = pneg %p312
        $region54: #{_matmul_padded.1} parent=35 // pred_check_branch
          %315 = sbr.rel (%p313) target = $region56
        $region55: #{_matmul_padded.1} parent=35 // pred_region
          %316 = vst [vmem:[#allocation2] sm:$0xff] 0.0
          %317 = vst [vmem:[#allocation2 + $0x8] sm:$0xff] 0.0
          %318 = vst [vmem:[#allocation2 + $0x10] sm:$0xff] 0.0
          %319 = vst [vmem:[#allocation2 + $0x18] sm:$0xff] 0.0
          %320 = vst [vmem:[#allocation2 + $0x20] sm:$0xff] 0.0
          %321 = vst [vmem:[#allocation2 + $0x28] sm:$0xff] 0.0
          %322 = vst [vmem:[#allocation2 + $0x30] sm:$0xff] 0.0
          %323 = vst [vmem:[#allocation2 + $0x38] sm:$0xff] 0.0
          %324 = vst [vmem:[#allocation2 + $0x40] sm:$0xff] 0.0
          %325 = vst [vmem:[#allocation2 + $0x48] sm:$0xff] 0.0
          %326 = vst [vmem:[#allocation2 + $0x50] sm:$0xff] 0.0
          %327 = vst [vmem:[#allocation2 + $0x58] sm:$0xff] 0.0
          %328 = vst [vmem:[#allocation2 + $0x60] sm:$0xff] 0.0
          %329 = vst [vmem:[#allocation2 + $0x68] sm:$0xff] 0.0
          %330 = vst [vmem:[#allocation2 + $0x70] sm:$0xff] 0.0
          %331 = vst [vmem:[#allocation2 + $0x78] sm:$0xff] 0.0
          %332 = vst [vmem:[#allocation2 + $0x80] sm:$0xff] 0.0
          %333 = vst [vmem:[#allocation2 + $0x88] sm:$0xff] 0.0
          %334 = vst [vmem:[#allocation2 + $0x90] sm:$0xff] 0.0
          %335 = vst [vmem:[#allocation2 + $0x98] sm:$0xff] 0.0
          %336 = vst [vmem:[#allocation2 + $0xa0] sm:$0xff] 0.0
          %337 = vst [vmem:[#allocation2 + $0xa8] sm:$0xff] 0.0
          %338 = vst [vmem:[#allocation2 + $0xb0] sm:$0xff] 0.0
          %339 = vst [vmem:[#allocation2 + $0xb8] sm:$0xff] 0.0
          %340 = vst [vmem:[#allocation2 + $0xc0] sm:$0xff] 0.0
          %341 = vst [vmem:[#allocation2 + $0xc8] sm:$0xff] 0.0
          %342 = vst [vmem:[#allocation2 + $0xd0] sm:$0xff] 0.0
          %343 = vst [vmem:[#allocation2 + $0xd8] sm:$0xff] 0.0
          %344 = vst [vmem:[#allocation2 + $0xe0] sm:$0xff] 0.0
          %345 = vst [vmem:[#allocation2 + $0xe8] sm:$0xff] 0.0
          %346 = vst [vmem:[#allocation2 + $0xf0] sm:$0xff] 0.0
          %347 = vst [vmem:[#allocation2 + $0xf8] sm:$0xff] 0.0
        $region56: #{_matmul_padded.1} parent=35 // pred_fallthru
          _
        %v348 = vld [vmem:[%s270] sm:$0xff]
        %v349 = vld [vmem:[%s270 + $0x8] sm:$0xff]
        %v350 = vld [vmem:[%s270 + $0x10] sm:$0xff]
        %v351 = vld [vmem:[%s270 + $0x18] sm:$0xff]
        %v352 = vld [vmem:[%s270 + $0x20] sm:$0xff]
        %v353 = vld [vmem:[%s270 + $0x28] sm:$0xff]
        %v354 = vld [vmem:[%s270 + $0x30] sm:$0xff]
        %v355 = vld [vmem:[%s270 + $0x38] sm:$0xff]
        %v356 = vld [vmem:[%s270 + $0x40] sm:$0xff]
        %v357 = vld [vmem:[%s270 + $0x48] sm:$0xff]
        %v358 = vld [vmem:[%s270 + $0x50] sm:$0xff]
        %v359 = vld [vmem:[%s270 + $0x58] sm:$0xff]
        %v360 = vld [vmem:[%s270 + $0x60] sm:$0xff]
        %v361 = vld [vmem:[%s270 + $0x68] sm:$0xff]
        %v362 = vld [vmem:[%s270 + $0x70] sm:$0xff]
        %v363 = vld [vmem:[%s270 + $0x78] sm:$0xff]
        %v364 = vld [vmem:[%s270 + $0x80] sm:$0xff]
        %v365 = vld [vmem:[%s270 + $0x88] sm:$0xff]
        %v366 = vld [vmem:[%s270 + $0x90] sm:$0xff]
        %v367 = vld [vmem:[%s270 + $0x98] sm:$0xff]
        %v368 = vld [vmem:[%s270 + $0xa0] sm:$0xff]
        %v369 = vld [vmem:[%s270 + $0xa8] sm:$0xff]
        %v370 = vld [vmem:[%s270 + $0xb0] sm:$0xff]
        %v371 = vld [vmem:[%s270 + $0xb8] sm:$0xff]
        %v372 = vld [vmem:[%s270 + $0xc0] sm:$0xff]
        %v373 = vld [vmem:[%s270 + $0xc8] sm:$0xff]
        %v374 = vld [vmem:[%s270 + $0xd0] sm:$0xff]
        %v375 = vld [vmem:[%s270 + $0xd8] sm:$0xff]
        %v376 = vld [vmem:[%s270 + $0xe0] sm:$0xff]
        %v377 = vld [vmem:[%s270 + $0xe8] sm:$0xff]
        %v378 = vld [vmem:[%s270 + $0xf0] sm:$0xff]
        %v379 = vld [vmem:[%s270 + $0xf8] sm:$0xff]
        %v380 = vld [vmem:[%s270 + $0x100] sm:$0xff]
        %v381 = vld [vmem:[%s270 + $0x108] sm:$0xff]
        %v382 = vld [vmem:[%s270 + $0x110] sm:$0xff]
        %v383 = vld [vmem:[%s270 + $0x118] sm:$0xff]
        %v384 = vld [vmem:[%s270 + $0x120] sm:$0xff]
        %v385 = vld [vmem:[%s270 + $0x128] sm:$0xff]
        %v386 = vld [vmem:[%s270 + $0x130] sm:$0xff]
        %v387 = vld [vmem:[%s270 + $0x138] sm:$0xff]
        %v388 = vld [vmem:[%s270 + $0x140] sm:$0xff]
        %v389 = vld [vmem:[%s270 + $0x148] sm:$0xff]
        %v390 = vld [vmem:[%s270 + $0x150] sm:$0xff]
        %v391 = vld [vmem:[%s270 + $0x158] sm:$0xff]
        %v392 = vld [vmem:[%s270 + $0x160] sm:$0xff]
        %v393 = vld [vmem:[%s270 + $0x168] sm:$0xff]
        %v394 = vld [vmem:[%s270 + $0x170] sm:$0xff]
        %v395 = vld [vmem:[%s270 + $0x178] sm:$0xff]
        %v396 = vld [vmem:[%s270 + $0x180] sm:$0xff]
        %v397 = vld [vmem:[%s270 + $0x188] sm:$0xff]
        %v398 = vld [vmem:[%s270 + $0x190] sm:$0xff]
        %v399 = vld [vmem:[%s270 + $0x198] sm:$0xff]
        %v400 = vld [vmem:[%s270 + $0x1a0] sm:$0xff]
        %v401 = vld [vmem:[%s270 + $0x1a8] sm:$0xff]
        %v402 = vld [vmem:[%s270 + $0x1b0] sm:$0xff]
        %v403 = vld [vmem:[%s270 + $0x1b8] sm:$0xff]
        %v404 = vld [vmem:[%s270 + $0x1c0] sm:$0xff]
        %v405 = vld [vmem:[%s270 + $0x1c8] sm:$0xff]
        %v406 = vld [vmem:[%s270 + $0x1d0] sm:$0xff]
        %v407 = vld [vmem:[%s270 + $0x1d8] sm:$0xff]
        %v408 = vld [vmem:[%s270 + $0x1e0] sm:$0xff]
        %v409 = vld [vmem:[%s270 + $0x1e8] sm:$0xff]
        %v410 = vld [vmem:[%s270 + $0x1f0] sm:$0xff]
        %v411 = vld [vmem:[%s270 + $0x1f8] sm:$0xff]
        %v412 = vld [vmem:[#allocation2] sm:$0xff]
        %v413 = vld [vmem:[#allocation2 + $0x8] sm:$0xff]
        %v414 = vld [vmem:[#allocation2 + $0x10] sm:$0xff]
        %v415 = vld [vmem:[#allocation2 + $0x18] sm:$0xff]
        %v416 = vld [vmem:[#allocation2 + $0x20] sm:$0xff]
        %v417 = vld [vmem:[#allocation2 + $0x28] sm:$0xff]
        %v418 = vld [vmem:[#allocation2 + $0x30] sm:$0xff]
        %v419 = vld [vmem:[#allocation2 + $0x38] sm:$0xff]
        %v420 = vld [vmem:[#allocation2 + $0x40] sm:$0xff]
        %v421 = vld [vmem:[#allocation2 + $0x48] sm:$0xff]
        %v422 = vld [vmem:[#allocation2 + $0x50] sm:$0xff]
        %v423 = vld [vmem:[#allocation2 + $0x58] sm:$0xff]
        %v424 = vld [vmem:[#allocation2 + $0x60] sm:$0xff]
        %v425 = vld [vmem:[#allocation2 + $0x68] sm:$0xff]
        %v426 = vld [vmem:[#allocation2 + $0x70] sm:$0xff]
        %v427 = vld [vmem:[#allocation2 + $0x78] sm:$0xff]
        %v428 = vld [vmem:[#allocation2 + $0x80] sm:$0xff]
        %v429 = vld [vmem:[#allocation2 + $0x88] sm:$0xff]
        %v430 = vld [vmem:[#allocation2 + $0x90] sm:$0xff]
        %v431 = vld [vmem:[#allocation2 + $0x98] sm:$0xff]
        %v432 = vld [vmem:[#allocation2 + $0xa0] sm:$0xff]
        %v433 = vld [vmem:[#allocation2 + $0xa8] sm:$0xff]
        %v434 = vld [vmem:[#allocation2 + $0xb0] sm:$0xff]
        %v435 = vld [vmem:[#allocation2 + $0xb8] sm:$0xff]
        %v436 = vld [vmem:[#allocation2 + $0xc0] sm:$0xff]
        %v437 = vld [vmem:[#allocation2 + $0xc8] sm:$0xff]
        %v438 = vld [vmem:[#allocation2 + $0xd0] sm:$0xff]
        %v439 = vld [vmem:[#allocation2 + $0xd8] sm:$0xff]
        %v440 = vld [vmem:[#allocation2 + $0xe0] sm:$0xff]
        %v441 = vld [vmem:[#allocation2 + $0xe8] sm:$0xff]
        %v442 = vld [vmem:[#allocation2 + $0xf0] sm:$0xff]
        %v443 = vld [vmem:[#allocation2 + $0xf8] sm:$0xff]
        %v444 = vpack.c.bf16 %v350, %v348
        %v445 = vpack.c.bf16 %v351, %v349
        %v446 = vpack.c.bf16 %v354, %v352
        %v447 = vpack.c.bf16 %v355, %v353
        %v448 = vpack.c.bf16 %v358, %v356
        %v449 = vpack.c.bf16 %v359, %v357
        %v450 = vpack.c.bf16 %v362, %v360
        %v451 = vpack.c.bf16 %v363, %v361
        %v452 = vpack.c.bf16 %v366, %v364
        %v453 = vpack.c.bf16 %v367, %v365
        %v454 = vpack.c.bf16 %v370, %v368
        %v455 = vpack.c.bf16 %v371, %v369
        %v456 = vpack.c.bf16 %v374, %v372
        %v457 = vpack.c.bf16 %v375, %v373
        %v458 = vpack.c.bf16 %v378, %v376
        %v459 = vpack.c.bf16 %v379, %v377
        %v460 = vpack.c.bf16 %v382, %v380
        %v461 = vpack.c.bf16 %v383, %v381
        %v462 = vpack.c.bf16 %v386, %v384
        %v463 = vpack.c.bf16 %v387, %v385
        %v464 = vpack.c.bf16 %v390, %v388
        %v465 = vpack.c.bf16 %v391, %v389
        %v466 = vpack.c.bf16 %v394, %v392
        %v467 = vpack.c.bf16 %v395, %v393
        %v468 = vpack.c.bf16 %v398, %v396
        %v469 = vpack.c.bf16 %v399, %v397
        %v470 = vpack.c.bf16 %v402, %v400
        %v471 = vpack.c.bf16 %v403, %v401
        %v472 = vpack.c.bf16 %v406, %v404
        %v473 = vpack.c.bf16 %v407, %v405
        %v474 = vpack.c.bf16 %v410, %v408
        %v475 = vpack.c.bf16 %v411, %v409
        %v476 = vld [vmem:[#allocation6] sm:$0xf]
        %v477 = vld [vmem:[#allocation6 + $0x4] sm:$0xf]
        %v478 = vld [vmem:[#allocation6 + $0x8] sm:$0xf]
        %v479 = vld [vmem:[#allocation6 + $0xc] sm:$0xf]
        %v480 = vld [vmem:[#allocation6 + $0x10] sm:$0xf]
        %v481 = vld [vmem:[#allocation6 + $0x14] sm:$0xf]
        %v482 = vld [vmem:[#allocation6 + $0x18] sm:$0xf]
        %v483 = vld [vmem:[#allocation6 + $0x1c] sm:$0xf]
        %v484 = vld [vmem:[#allocation6 + $0x20] sm:$0xf]
        %v485 = vld [vmem:[#allocation6 + $0x24] sm:$0xf]
        %v486 = vld [vmem:[#allocation6 + $0x28] sm:$0xf]
        %v487 = vld [vmem:[#allocation6 + $0x2c] sm:$0xf]
        %v488 = vld [vmem:[#allocation6 + $0x30] sm:$0xf]
        %v489 = vld [vmem:[#allocation6 + $0x34] sm:$0xf]
        %v490 = vld [vmem:[#allocation6 + $0x38] sm:$0xf]
        %v491 = vld [vmem:[#allocation6 + $0x3c] sm:$0xf]
        %v492 = vld [vmem:[#allocation6 + $0x40] sm:$0xf]
        %v493 = vld [vmem:[#allocation6 + $0x44] sm:$0xf]
        %v494 = vld [vmem:[#allocation6 + $0x48] sm:$0xf]
        %v495 = vld [vmem:[#allocation6 + $0x4c] sm:$0xf]
        %v496 = vld [vmem:[#allocation6 + $0x50] sm:$0xf]
        %v497 = vld [vmem:[#allocation6 + $0x54] sm:$0xf]
        %v498 = vld [vmem:[#allocation6 + $0x58] sm:$0xf]
        %v499 = vld [vmem:[#allocation6 + $0x5c] sm:$0xf]
        %v500 = vld [vmem:[#allocation6 + $0x60] sm:$0xf]
        %v501 = vld [vmem:[#allocation6 + $0x64] sm:$0xf]
        %v502 = vld [vmem:[#allocation6 + $0x68] sm:$0xf]
        %v503 = vld [vmem:[#allocation6 + $0x6c] sm:$0xf]
        %v504 = vld [vmem:[#allocation6 + $0x70] sm:$0xf]
        %v505 = vld [vmem:[#allocation6 + $0x74] sm:$0xf]
        %v506 = vld [vmem:[#allocation6 + $0x78] sm:$0xf]
        %v507 = vld [vmem:[#allocation6 + $0x7c] sm:$0xf]
        %v540 = vunpack.c.l.b16 %v476
        %v541 = vunpack.c.l.b16 %v477
        %v542 = vunpack.c.l.b16 %v478
        %v543 = vunpack.c.l.b16 %v479
        %v544 = vunpack.c.l.b16 %v480
        %v545 = vunpack.c.l.b16 %v481
        %v546 = vunpack.c.l.b16 %v482
        %v547 = vunpack.c.l.b16 %v483
        %v548 = vunpack.c.l.b16 %v484
        %v549 = vunpack.c.l.b16 %v485
        %v550 = vunpack.c.l.b16 %v486
        %v551 = vunpack.c.l.b16 %v487
        %v552 = vunpack.c.l.b16 %v488
        %v553 = vunpack.c.l.b16 %v489
        %v554 = vunpack.c.l.b16 %v490
        %v555 = vunpack.c.l.b16 %v491
        %v556 = vunpack.c.l.b16 %v492
        %v557 = vunpack.c.l.b16 %v493
        %v558 = vunpack.c.l.b16 %v494
        %v559 = vunpack.c.l.b16 %v495
        %v560 = vunpack.c.l.b16 %v496
        %v561 = vunpack.c.l.b16 %v497
        %v562 = vunpack.c.l.b16 %v498
        %v563 = vunpack.c.l.b16 %v499
        %v564 = vunpack.c.l.b16 %v500
        %v565 = vunpack.c.l.b16 %v501
        %v566 = vunpack.c.l.b16 %v502
        %v567 = vunpack.c.l.b16 %v503
        %v568 = vunpack.c.l.b16 %v504
        %v569 = vunpack.c.l.b16 %v505
        %v570 = vunpack.c.l.b16 %v506
        %v571 = vunpack.c.l.b16 %v507
        %v572 = vpack.c.b16 %v541, %v540
        %v573 = vpack.c.b16 %v543, %v542
        %v574 = vpack.c.b16 %v545, %v544
        %v575 = vpack.c.b16 %v547, %v546
        %v576 = vpack.c.b16 %v549, %v548
        %v577 = vpack.c.b16 %v551, %v550
        %v578 = vpack.c.b16 %v553, %v552
        %v579 = vpack.c.b16 %v555, %v554
        %v580 = vpack.c.b16 %v557, %v556
        %v581 = vpack.c.b16 %v559, %v558
        %v582 = vpack.c.b16 %v561, %v560
        %v583 = vpack.c.b16 %v563, %v562
        %v584 = vpack.c.b16 %v565, %v564
        %v585 = vpack.c.b16 %v567, %v566
        %v586 = vpack.c.b16 %v569, %v568
        %v587 = vpack.c.b16 %v571, %v570
        %604 = vmatprep.subr.bf16.mxu0 0
        %605 = vmatpush1.bf16.msra.mxu0 %v579
        %606 = vmatprep.subr.bf16.mxu0 0
        %607 = vmatpush1.bf16.msra.mxu0 %v578
        %608 = vmatprep.subr.bf16.mxu0 0
        %609 = vmatpush1.bf16.msra.mxu0 %v577
        %610 = vmatprep.subr.bf16.mxu0 0
        %611 = vmatpush1.bf16.msra.mxu0 %v576
        %612 = vmatprep.subr.bf16.mxu0 0
        %613 = vmatpush1.bf16.msra.mxu0 %v575
        %614 = vmatprep.subr.bf16.mxu0 0
        %615 = vmatpush1.bf16.msra.mxu0 %v574
        %616 = vmatprep.subr.bf16.mxu0 0
        %617 = vmatpush1.bf16.msra.mxu0 %v573
        %618 = vmatprep.subr.bf16.mxu0 0
        %619 = vmatpush1.bf16.msra.mxu0 %v572
        %620 = vmatprep.subr.bf16.mxu0 0
        %621 = vmatpush2.bf16.msra.mxu0 %v587
        %622 = vmatprep.subr.bf16.mxu0 0
        %623 = vmatpush2.bf16.msra.mxu0 %v586
        %624 = vmatprep.subr.bf16.mxu0 0
        %625 = vmatpush2.bf16.msra.mxu0 %v585
        %626 = vmatprep.subr.bf16.mxu0 0
        %627 = vmatpush2.bf16.msra.mxu0 %v584
        %628 = vmatprep.subr.bf16.mxu0 0
        %629 = vmatpush2.bf16.msra.mxu0 %v583
        %630 = vmatprep.subr.bf16.mxu0 0
        %631 = vmatpush2.bf16.msra.mxu0 %v582
        %632 = vmatprep.subr.bf16.mxu0 0
        %633 = vmatpush2.bf16.msra.mxu0 %v581
        %634 = vmatprep.subr.bf16.mxu0 0
        %635 = vmatpush2.bf16.msra.mxu0 %v580
        %636 = vmatprep.mubr.bf16.mxu0 %v445
        %637 = vmatmul.mubr.bf16.gmra.mxu0 %v444
        %v638 = vpop.f32.mrf.mxu0
        %v639 = vadd.f32 0.0, %v638
        %v640 = vpop.f32.mrf.mxu0
        %v641 = vpop.f32.mrf.mxu0
        %v642 = vadd.f32 0.0, %v641
        %v643 = vpop.f32.mrf.mxu0
        %644 = vmatprep.mubr.bf16.mxu0 %v447
        %645 = vmatmul.mubr.bf16.gmra.mxu0 %v446
        %v646 = vpop.f32.mrf.mxu0
        %v647 = vadd.f32 0.0, %v646
        %v648 = vpop.f32.mrf.mxu0
        %v649 = vpop.f32.mrf.mxu0
        %v650 = vadd.f32 0.0, %v649
        %v651 = vpop.f32.mrf.mxu0
        %652 = vmatprep.mubr.bf16.mxu0 %v449
        %653 = vmatmul.mubr.bf16.gmra.mxu0 %v448
        %v654 = vpop.f32.mrf.mxu0
        %v655 = vadd.f32 0.0, %v654
        %v656 = vpop.f32.mrf.mxu0
        %v657 = vpop.f32.mrf.mxu0
        %v658 = vadd.f32 0.0, %v657
        %v659 = vpop.f32.mrf.mxu0
        %660 = vmatprep.mubr.bf16.mxu0 %v451
        %661 = vmatmul.mubr.bf16.gmra.mxu0 %v450
        %v662 = vpop.f32.mrf.mxu0
        %v663 = vadd.f32 0.0, %v662
        %v664 = vpop.f32.mrf.mxu0
        %v665 = vpop.f32.mrf.mxu0
        %v666 = vadd.f32 0.0, %v665
        %v667 = vpop.f32.mrf.mxu0
        %668 = vmatprep.mubr.bf16.mxu0 %v453
        %669 = vmatmul.mubr.bf16.gmra.mxu0 %v452
        %v670 = vpop.f32.mrf.mxu0
        %v671 = vadd.f32 0.0, %v670
        %v672 = vpop.f32.mrf.mxu0
        %v673 = vpop.f32.mrf.mxu0
        %v674 = vadd.f32 0.0, %v673
        %v675 = vpop.f32.mrf.mxu0
        %676 = vmatprep.mubr.bf16.mxu0 %v455
        %677 = vmatmul.mubr.bf16.gmra.mxu0 %v454
        %v678 = vpop.f32.mrf.mxu0
        %v679 = vadd.f32 0.0, %v678
        %v680 = vpop.f32.mrf.mxu0
        %v681 = vpop.f32.mrf.mxu0
        %v682 = vadd.f32 0.0, %v681
        %v683 = vpop.f32.mrf.mxu0
        %684 = vmatprep.mubr.bf16.mxu0 %v457
        %685 = vmatmul.mubr.bf16.gmra.mxu0 %v456
        %v686 = vpop.f32.mrf.mxu0
        %v687 = vadd.f32 0.0, %v686
        %v688 = vpop.f32.mrf.mxu0
        %v689 = vpop.f32.mrf.mxu0
        %v690 = vadd.f32 0.0, %v689
        %v691 = vpop.f32.mrf.mxu0
        %692 = vmatprep.mubr.bf16.mxu0 %v459
        %693 = vmatmul.mubr.bf16.gmra.mxu0 %v458
        %v694 = vpop.f32.mrf.mxu0
        %v695 = vadd.f32 0.0, %v694
        %v696 = vpop.f32.mrf.mxu0
        %v697 = vpop.f32.mrf.mxu0
        %v698 = vadd.f32 0.0, %v697
        %v699 = vpop.f32.mrf.mxu0
        %700 = vmatprep.mubr.bf16.mxu0 %v461
        %701 = vmatmul.mubr.bf16.gmra.mxu0 %v460
        %v702 = vpop.f32.mrf.mxu0
        %v703 = vadd.f32 0.0, %v702
        %v704 = vpop.f32.mrf.mxu0
        %v705 = vpop.f32.mrf.mxu0
        %v706 = vadd.f32 0.0, %v705
        %v707 = vpop.f32.mrf.mxu0
        %708 = vmatprep.mubr.bf16.mxu0 %v463
        %709 = vmatmul.mubr.bf16.gmra.mxu0 %v462
        %v710 = vpop.f32.mrf.mxu0
        %v711 = vadd.f32 0.0, %v710
        %v712 = vpop.f32.mrf.mxu0
        %v713 = vpop.f32.mrf.mxu0
        %v714 = vadd.f32 0.0, %v713
        %v715 = vpop.f32.mrf.mxu0
        %716 = vmatprep.mubr.bf16.mxu0 %v465
        %717 = vmatmul.mubr.bf16.gmra.mxu0 %v464
        %v718 = vpop.f32.mrf.mxu0
        %v719 = vadd.f32 0.0, %v718
        %v720 = vpop.f32.mrf.mxu0
        %v721 = vpop.f32.mrf.mxu0
        %v722 = vadd.f32 0.0, %v721
        %v723 = vpop.f32.mrf.mxu0
        %724 = vmatprep.mubr.bf16.mxu0 %v467
        %725 = vmatmul.mubr.bf16.gmra.mxu0 %v466
        %v726 = vpop.f32.mrf.mxu0
        %v727 = vadd.f32 0.0, %v726
        %v728 = vpop.f32.mrf.mxu0
        %v729 = vpop.f32.mrf.mxu0
        %v730 = vadd.f32 0.0, %v729
        %v731 = vpop.f32.mrf.mxu0
        %732 = vmatprep.mubr.bf16.mxu0 %v469
        %733 = vmatmul.mubr.bf16.gmra.mxu0 %v468
        %v734 = vpop.f32.mrf.mxu0
        %v735 = vadd.f32 0.0, %v734
        %v736 = vpop.f32.mrf.mxu0
        %v737 = vpop.f32.mrf.mxu0
        %v738 = vadd.f32 0.0, %v737
        %v739 = vpop.f32.mrf.mxu0
        %740 = vmatprep.mubr.bf16.mxu0 %v471
        %741 = vmatmul.mubr.bf16.gmra.mxu0 %v470
        %v742 = vpop.f32.mrf.mxu0
        %v743 = vadd.f32 0.0, %v742
        %v744 = vpop.f32.mrf.mxu0
        %v745 = vpop.f32.mrf.mxu0
        %v746 = vadd.f32 0.0, %v745
        %v747 = vpop.f32.mrf.mxu0
        %748 = vmatprep.mubr.bf16.mxu0 %v473
        %749 = vmatmul.mubr.bf16.gmra.mxu0 %v472
        %v750 = vpop.f32.mrf.mxu0
        %v751 = vadd.f32 0.0, %v750
        %v752 = vpop.f32.mrf.mxu0
        %v753 = vpop.f32.mrf.mxu0
        %v754 = vadd.f32 0.0, %v753
        %v755 = vpop.f32.mrf.mxu0
        %756 = vmatprep.mubr.bf16.mxu0 %v475
        %757 = vmatmul.mubr.bf16.gmra.mxu0 %v474
        %v758 = vpop.f32.mrf.mxu0
        %v759 = vadd.f32 0.0, %v758
        %v760 = vpop.f32.mrf.mxu0
        %v761 = vpop.f32.mrf.mxu0
        %v762 = vadd.f32 0.0, %v761
        %v763 = vpop.f32.mrf.mxu0
        %764 = vdwg.mxu0
        %v765 = vadd.f32 %v412, %v639
        %v766 = vadd.f32 %v413, %v642
        %v767 = vadd.f32 %v414, %v647
        %v768 = vadd.f32 %v415, %v650
        %v769 = vadd.f32 %v416, %v655
        %v770 = vadd.f32 %v417, %v658
        %v771 = vadd.f32 %v418, %v663
        %v772 = vadd.f32 %v419, %v666
        %v773 = vadd.f32 %v420, %v671
        %v774 = vadd.f32 %v421, %v674
        %v775 = vadd.f32 %v422, %v679
        %v776 = vadd.f32 %v423, %v682
        %v777 = vadd.f32 %v424, %v687
        %v778 = vadd.f32 %v425, %v690
        %v779 = vadd.f32 %v426, %v695
        %v780 = vadd.f32 %v427, %v698
        %v781 = vadd.f32 %v428, %v703
        %v782 = vadd.f32 %v429, %v706
        %v783 = vadd.f32 %v430, %v711
        %v784 = vadd.f32 %v431, %v714
        %v785 = vadd.f32 %v432, %v719
        %v786 = vadd.f32 %v433, %v722
        %v787 = vadd.f32 %v434, %v727
        %v788 = vadd.f32 %v435, %v730
        %v789 = vadd.f32 %v436, %v735
        %v790 = vadd.f32 %v437, %v738
        %v791 = vadd.f32 %v438, %v743
        %v792 = vadd.f32 %v439, %v746
        %v793 = vadd.f32 %v440, %v751
        %v794 = vadd.f32 %v441, %v754
        %v795 = vadd.f32 %v442, %v759
        %v796 = vadd.f32 %v443, %v762
        %797 = vst [vmem:[#allocation2] sm:$0xff] %v765
        %798 = vst [vmem:[#allocation2 + $0x8] sm:$0xff] %v766
        %799 = vst [vmem:[#allocation2 + $0x10] sm:$0xff] %v767
        %800 = vst [vmem:[#allocation2 + $0x18] sm:$0xff] %v768
        %801 = vst [vmem:[#allocation2 + $0x20] sm:$0xff] %v769
        %802 = vst [vmem:[#allocation2 + $0x28] sm:$0xff] %v770
        %803 = vst [vmem:[#allocation2 + $0x30] sm:$0xff] %v771
        %804 = vst [vmem:[#allocation2 + $0x38] sm:$0xff] %v772
        %805 = vst [vmem:[#allocation2 + $0x40] sm:$0xff] %v773
        %806 = vst [vmem:[#allocation2 + $0x48] sm:$0xff] %v774
        %807 = vst [vmem:[#allocation2 + $0x50] sm:$0xff] %v775
        %808 = vst [vmem:[#allocation2 + $0x58] sm:$0xff] %v776
        %809 = vst [vmem:[#allocation2 + $0x60] sm:$0xff] %v777
        %810 = vst [vmem:[#allocation2 + $0x68] sm:$0xff] %v778
        %811 = vst [vmem:[#allocation2 + $0x70] sm:$0xff] %v779
        %812 = vst [vmem:[#allocation2 + $0x78] sm:$0xff] %v780
        %813 = vst [vmem:[#allocation2 + $0x80] sm:$0xff] %v781
        %814 = vst [vmem:[#allocation2 + $0x88] sm:$0xff] %v782
        %815 = vst [vmem:[#allocation2 + $0x90] sm:$0xff] %v783
        %816 = vst [vmem:[#allocation2 + $0x98] sm:$0xff] %v784
        %817 = vst [vmem:[#allocation2 + $0xa0] sm:$0xff] %v785
        %818 = vst [vmem:[#allocation2 + $0xa8] sm:$0xff] %v786
        %819 = vst [vmem:[#allocation2 + $0xb0] sm:$0xff] %v787
        %820 = vst [vmem:[#allocation2 + $0xb8] sm:$0xff] %v788
        %821 = vst [vmem:[#allocation2 + $0xc0] sm:$0xff] %v789
        %822 = vst [vmem:[#allocation2 + $0xc8] sm:$0xff] %v790
        %823 = vst [vmem:[#allocation2 + $0xd0] sm:$0xff] %v791
        %824 = vst [vmem:[#allocation2 + $0xd8] sm:$0xff] %v792
        %825 = vst [vmem:[#allocation2 + $0xe0] sm:$0xff] %v793
        %826 = vst [vmem:[#allocation2 + $0xe8] sm:$0xff] %v794
        %827 = vst [vmem:[#allocation2 + $0xf0] sm:$0xff] %v795
        %828 = vst [vmem:[#allocation2 + $0xf8] sm:$0xff] %v796
        // Predicated region
        $region57: #{_matmul_padded.1} parent=35 // pred_check
          %p829 = pneg %p312
        $region58: #{_matmul_padded.1} parent=35 // pred_check_branch
          %831 = sbr.rel (%p829) target = $region60
        $region59: #{_matmul_padded.1} parent=35 // pred_region
          %v832 = vld [vmem:[#allocation2] sm:$0xff]
          %v833 = vld [vmem:[#allocation2 + $0x8] sm:$0xff]
          %v834 = vld [vmem:[#allocation2 + $0x10] sm:$0xff]
          %v835 = vld [vmem:[#allocation2 + $0x18] sm:$0xff]
          %v836 = vld [vmem:[#allocation2 + $0x20] sm:$0xff]
          %v837 = vld [vmem:[#allocation2 + $0x28] sm:$0xff]
          %v838 = vld [vmem:[#allocation2 + $0x30] sm:$0xff]
          %v839 = vld [vmem:[#allocation2 + $0x38] sm:$0xff]
          %v840 = vld [vmem:[#allocation2 + $0x40] sm:$0xff]
          %v841 = vld [vmem:[#allocation2 + $0x48] sm:$0xff]
          %v842 = vld [vmem:[#allocation2 + $0x50] sm:$0xff]
          %v843 = vld [vmem:[#allocation2 + $0x58] sm:$0xff]
          %v844 = vld [vmem:[#allocation2 + $0x60] sm:$0xff]
          %v845 = vld [vmem:[#allocation2 + $0x68] sm:$0xff]
          %v846 = vld [vmem:[#allocation2 + $0x70] sm:$0xff]
          %v847 = vld [vmem:[#allocation2 + $0x78] sm:$0xff]
          %v848 = vld [vmem:[#allocation2 + $0x80] sm:$0xff]
          %v849 = vld [vmem:[#allocation2 + $0x88] sm:$0xff]
          %v850 = vld [vmem:[#allocation2 + $0x90] sm:$0xff]
          %v851 = vld [vmem:[#allocation2 + $0x98] sm:$0xff]
          %v852 = vld [vmem:[#allocation2 + $0xa0] sm:$0xff]
          %v853 = vld [vmem:[#allocation2 + $0xa8] sm:$0xff]
          %v854 = vld [vmem:[#allocation2 + $0xb0] sm:$0xff]
          %v855 = vld [vmem:[#allocation2 + $0xb8] sm:$0xff]
          %v856 = vld [vmem:[#allocation2 + $0xc0] sm:$0xff]
          %v857 = vld [vmem:[#allocation2 + $0xc8] sm:$0xff]
          %v858 = vld [vmem:[#allocation2 + $0xd0] sm:$0xff]
          %v859 = vld [vmem:[#allocation2 + $0xd8] sm:$0xff]
          %v860 = vld [vmem:[#allocation2 + $0xe0] sm:$0xff]
          %v861 = vld [vmem:[#allocation2 + $0xe8] sm:$0xff]
          %v862 = vld [vmem:[#allocation2 + $0xf0] sm:$0xff]
          %v863 = vld [vmem:[#allocation2 + $0xf8] sm:$0xff]
          %v864 = vld [vmem:[#allocation8] sm:$0x1]
          %v866 = vlaneseq
          %v867 = vshrl.u32 %v866, 7
          %v868 = vsub.s32 0, %v867
          %v869 = vrot.slane %v864, %v868
          %v871 = vmul.f32 %v832, %v869
          %v872 = vmul.f32 %v833, %v869
          %v873 = vmul.f32 %v834, %v869
          %v874 = vmul.f32 %v835, %v869
          %v875 = vmul.f32 %v836, %v869
          %v876 = vmul.f32 %v837, %v869
          %v877 = vmul.f32 %v838, %v869
          %v878 = vmul.f32 %v839, %v869
          %v879 = vmul.f32 %v840, %v869
          %v880 = vmul.f32 %v841, %v869
          %v881 = vmul.f32 %v842, %v869
          %v882 = vmul.f32 %v843, %v869
          %v883 = vmul.f32 %v844, %v869
          %v884 = vmul.f32 %v845, %v869
          %v885 = vmul.f32 %v846, %v869
          %v886 = vmul.f32 %v847, %v869
          %v887 = vmul.f32 %v848, %v869
          %v888 = vmul.f32 %v849, %v869
          %v889 = vmul.f32 %v850, %v869
          %v890 = vmul.f32 %v851, %v869
          %v891 = vmul.f32 %v852, %v869
          %v892 = vmul.f32 %v853, %v869
          %v893 = vmul.f32 %v854, %v869
          %v894 = vmul.f32 %v855, %v869
          %v895 = vmul.f32 %v856, %v869
          %v896 = vmul.f32 %v857, %v869
          %v897 = vmul.f32 %v858, %v869
          %v898 = vmul.f32 %v859, %v869
          %v899 = vmul.f32 %v860, %v869
          %v900 = vmul.f32 %v861, %v869
          %v901 = vmul.f32 %v862, %v869
          %v902 = vmul.f32 %v863, %v869
          %v903 = vld [vmem:[#allocation9] sm:$0x1]
          %v905 = vlaneseq
          %v906 = vshrl.u32 %v905, 7
          %v907 = vsub.s32 0, %v906
          %v908 = vrot.slane %v903, %v907
          %v910 = vadd.f32 %v871, %v908
          %v911 = vadd.f32 %v872, %v908
          %v912 = vadd.f32 %v873, %v908
          %v913 = vadd.f32 %v874, %v908
          %v914 = vadd.f32 %v875, %v908
          %v915 = vadd.f32 %v876, %v908
          %v916 = vadd.f32 %v877, %v908
          %v917 = vadd.f32 %v878, %v908
          %v918 = vadd.f32 %v879, %v908
          %v919 = vadd.f32 %v880, %v908
          %v920 = vadd.f32 %v881, %v908
          %v921 = vadd.f32 %v882, %v908
          %v922 = vadd.f32 %v883, %v908
          %v923 = vadd.f32 %v884, %v908
          %v924 = vadd.f32 %v885, %v908
          %v925 = vadd.f32 %v886, %v908
          %v926 = vadd.f32 %v887, %v908
          %v927 = vadd.f32 %v888, %v908
          %v928 = vadd.f32 %v889, %v908
          %v929 = vadd.f32 %v890, %v908
          %v930 = vadd.f32 %v891, %v908
          %v931 = vadd.f32 %v892, %v908
          %v932 = vadd.f32 %v893, %v908
          %v933 = vadd.f32 %v894, %v908
          %v934 = vadd.f32 %v895, %v908
          %v935 = vadd.f32 %v896, %v908
          %v936 = vadd.f32 %v897, %v908
          %v937 = vadd.f32 %v898, %v908
          %v938 = vadd.f32 %v899, %v908
          %v939 = vadd.f32 %v900, %v908
          %v940 = vadd.f32 %v901, %v908
          %v941 = vadd.f32 %v902, %v908
          %v942 = vmax.f32 %v910, 0.0
          %v943 = vmax.f32 %v911, 0.0
          %v944 = vmax.f32 %v912, 0.0
          %v945 = vmax.f32 %v913, 0.0
          %v946 = vmax.f32 %v914, 0.0
          %v947 = vmax.f32 %v915, 0.0
          %v948 = vmax.f32 %v916, 0.0
          %v949 = vmax.f32 %v917, 0.0
          %v950 = vmax.f32 %v918, 0.0
          %v951 = vmax.f32 %v919, 0.0
          %v952 = vmax.f32 %v920, 0.0
          %v953 = vmax.f32 %v921, 0.0
          %v954 = vmax.f32 %v922, 0.0
          %v955 = vmax.f32 %v923, 0.0
          %v956 = vmax.f32 %v924, 0.0
          %v957 = vmax.f32 %v925, 0.0
          %v958 = vmax.f32 %v926, 0.0
          %v959 = vmax.f32 %v927, 0.0
          %v960 = vmax.f32 %v928, 0.0
          %v961 = vmax.f32 %v929, 0.0
          %v962 = vmax.f32 %v930, 0.0
          %v963 = vmax.f32 %v931, 0.0
          %v964 = vmax.f32 %v932, 0.0
          %v965 = vmax.f32 %v933, 0.0
          %v966 = vmax.f32 %v934, 0.0
          %v967 = vmax.f32 %v935, 0.0
          %v968 = vmax.f32 %v936, 0.0
          %v969 = vmax.f32 %v937, 0.0
          %v970 = vmax.f32 %v938, 0.0
          %v971 = vmax.f32 %v939, 0.0
          %v972 = vmax.f32 %v940, 0.0
          %v973 = vmax.f32 %v941, 0.0
          %974 = vst [vmem:[%s306] sm:$0xff] %v942
          %975 = vst [vmem:[%s306 + $0x8] sm:$0xff] %v943
          %976 = vst [vmem:[%s306 + $0x10] sm:$0xff] %v944
          %977 = vst [vmem:[%s306 + $0x18] sm:$0xff] %v945
          %978 = vst [vmem:[%s306 + $0x20] sm:$0xff] %v946
          %979 = vst [vmem:[%s306 + $0x28] sm:$0xff] %v947
          %980 = vst [vmem:[%s306 + $0x30] sm:$0xff] %v948
          %981 = vst [vmem:[%s306 + $0x38] sm:$0xff] %v949
          %982 = vst [vmem:[%s306 + $0x40] sm:$0xff] %v950
          %983 = vst [vmem:[%s306 + $0x48] sm:$0xff] %v951
          %984 = vst [vmem:[%s306 + $0x50] sm:$0xff] %v952
          %985 = vst [vmem:[%s306 + $0x58] sm:$0xff] %v953
          %986 = vst [vmem:[%s306 + $0x60] sm:$0xff] %v954
          %987 = vst [vmem:[%s306 + $0x68] sm:$0xff] %v955
          %988 = vst [vmem:[%s306 + $0x70] sm:$0xff] %v956
          %989 = vst [vmem:[%s306 + $0x78] sm:$0xff] %v957
          %990 = vst [vmem:[%s306 + $0x80] sm:$0xff] %v958
          %991 = vst [vmem:[%s306 + $0x88] sm:$0xff] %v959
          %992 = vst [vmem:[%s306 + $0x90] sm:$0xff] %v960
          %993 = vst [vmem:[%s306 + $0x98] sm:$0xff] %v961
          %994 = vst [vmem:[%s306 + $0xa0] sm:$0xff] %v962
          %995 = vst [vmem:[%s306 + $0xa8] sm:$0xff] %v963
          %996 = vst [vmem:[%s306 + $0xb0] sm:$0xff] %v964
          %997 = vst [vmem:[%s306 + $0xb8] sm:$0xff] %v965
          %998 = vst [vmem:[%s306 + $0xc0] sm:$0xff] %v966
          %999 = vst [vmem:[%s306 + $0xc8] sm:$0xff] %v967
          %1000 = vst [vmem:[%s306 + $0xd0] sm:$0xff] %v968
          %1001 = vst [vmem:[%s306 + $0xd8] sm:$0xff] %v969
          %1002 = vst [vmem:[%s306 + $0xe0] sm:$0xff] %v970
          %1003 = vst [vmem:[%s306 + $0xe8] sm:$0xff] %v971
          %1004 = vst [vmem:[%s306 + $0xf0] sm:$0xff] %v972
          %1005 = vst [vmem:[%s306 + $0xf8] sm:$0xff] %v973
        $region60: #{_matmul_padded.1} parent=35 // pred_fallthru
          _
        %s1006 = sand.u32 %s160, 1
        %s1007 = scalar_lea.sflag [#allocation5], %s1006
        %s1008 = sand.u32 %s160, 1
        %s1009 = smul.addr %s1008, 256
        %s1010 = scalar_lea.vmem [#allocation11], %s1009
        // Predicated region
        $region61: #{_matmul_padded.1} parent=35 // pred_check
          %p1011 = pneg %p170
        $region62: #{_matmul_padded.1} parent=35 // pred_check_branch
          %1013 = sbr.rel (%p1011) target = $region64
        $region63: #{_matmul_padded.1} parent=35 // pred_region
          %s1014 = smul.u32 32, %s28
          %s1016 = ssub.s32 4096, 4096
          %1017 = vsyncadd %s1007, %s1016
          %s1018 = sadd.s32 %s29, %s1014
          %s1019 = smul.addr %s1018, 128
          %s1020 = scalar_lea.hbm %s4, %s1019
          %s1021 = sshll.u32 %s1010, 4
          %s1022 = int_to_ptr.vmem [resolvable:$true] %s1021
          %1027 = dma.vmem_to_hbm [thread:$0]  %s1022, 4096, %s1020, %s1007, 128, 128, 8
        $region64: #{_matmul_padded.1} parent=35 // pred_fallthru
          _
      $region36: #{_matmul_padded.1} parent=5 // pred_fallthru
        _
      %p1028 = scmp.le.s32.totalorder 2, %s18
      // Predicated region
      $region65: #{_matmul_padded.1} parent=5 // pred_check
        %p1029 = pneg %p1028
      $region66: #{_matmul_padded.1} parent=5 // pred_check_branch
        %1031 = sbr.rel (%p1029) target = $region68
      $region67: #{_matmul_padded.1} parent=5 // pred_region
        %s1032 = ssub.s32 %s18, 2
        // Predicated region
        $region69: #{_matmul_padded.1} parent=67 // pred_check
          %p1033 = pneg %p176
        $region70: #{_matmul_padded.1} parent=67 // pred_check_branch
          %1035 = sbr.rel (%p1033) target = $region72
        $region71: #{_matmul_padded.1} parent=67 // pred_region
          %s1036 = sand.u32 %s161, 1
          %s1037 = scalar_lea.sflag [#allocation5], %s1036
          %s1038 = sand.u32 %s161, 1
          %s1039 = smul.addr %s1038, 256
          %s1040 = scalar_lea.vmem [#allocation11], %s1039
          %1041 = dma.done %s1037, 4096
        $region72: #{_matmul_padded.1} parent=67 // pred_fallthru
          _
      $region68: #{_matmul_padded.1} parent=5 // pred_fallthru
        _
    $region6: #{_matmul_padded.1} parent=1 // loop_footer
      %s22 = sadd.s32 1, %s18
    $region7: #{_matmul_padded.1} parent=1 // loop_footer_branch
      %17 = sbr.rel target = $region3
    $region8: #{_matmul_padded.1} parent=1 // loop_exit
      _
    %1042 = vsyncpa [#allocation4], 1
    %s1043 = scalar_lea.sflag [#allocation4], 1
    %1044 = vsyncpa %s1043, 1
    %1045 = vsyncpa [#allocation7], 1
    %1046 = vsyncpa [#allocation10], 1
    %1047 = vsyncpa [#allocation5], 1
    %s1048 = scalar_lea.sflag [#allocation5], 1
    %1049 = vsyncpa %s1048, 1

</llo_original>
